<compile_context>
chip_gen: v6e
topology: v6e:2x2x1
jax: 0.10.0
libtpu: 0.0.40
codegen_flags: <defaults>
</compile_context>

<pallas_src>
import functools

import jax
import jax.numpy as jnp
from jax.experimental import pallas as pl
from jax.experimental.pallas import tpu as pltpu


def _round_up(x, m):
    return ((x + m - 1) // m) * m


def _vmem_capacity_bytes():
    """Per-core VMEM capacity, with a conservative fallback."""
    try:
        info = pltpu.get_tpu_info()
        cap = int(getattr(info, "vmem_capacity_bytes", 0) or 0)
        if cap > 0:
            return cap
    except Exception:
        pass
    return 64 << 20  # conservative (v7x per-TC VMEM)


def _resident_spec(shape):
    """BlockSpec for a grid-invariant operand: single-buffered (no useless
    double buffer for a constant index_map)."""
    idx = lambda i: (0, 0)
    try:
        return pl.BlockSpec(shape, idx, pipeline_mode=pl.Buffered(1))
    except TypeError:  # older jax without pipeline_mode kwarg
        return pl.BlockSpec(shape, idx)


def _ffn_kernel(x_ref, w1_ref, b1_ref, w2_ref, b2_ref, g_ref, beta_ref,
                o_ref, y_acc_ref, *, eps, hid_chunk, n_chunks):
    # Load the x tile ONCE; reuse for the MXU operand and the f32 residual.
    xv = x_ref[...]
    x_f32 = xv.astype(jnp.float32)               # residual / LayerNorm path
    x_mxu = xv.astype(w1_ref.dtype)              # MXU operand (bf16 or f32)

    if n_chunks == 1:
        # Fast path: whole hidden dim fits in one chunk.
        h = (jnp.dot(x_mxu, w1_ref[...], preferred_element_type=jnp.float32)
             + b1_ref[...].astype(jnp.float32))
        h = jnp.maximum(h, 0.0)                  # ReLU in f32
        y = jnp.dot(h.astype(w2_ref.dtype), w2_ref[...],
                    preferred_element_type=jnp.float32)
    else:
        # Hidden dim streamed in bounded chunks.  fori_loop (not an unrolled
        # Python for) bounds the live range of the (tm, hid_chunk) f32
        # intermediate; the running sum lives in a VMEM scratch ref.
        y_acc_ref[...] = jnp.zeros_like(y_acc_ref)

        def body(c, carry):
            lo = pl.multiple_of(c * hid_chunk, hid_chunk)
            w1c = w1_ref[:, pl.ds(lo, hid_chunk)]
            b1c = b1_ref[:, pl.ds(lo, hid_chunk)].astype(jnp.float32)
            h = jnp.dot(x_mxu, w1c, preferred_element_type=jnp.float32) + b1c
            h = jnp.maximum(h, 0.0)
            w2c = w2_ref[pl.ds(lo, hid_chunk), :]
            y_acc_ref[...] += jnp.dot(h.astype(w2_ref.dtype), w2c,
                                      preferred_element_type=jnp.float32)
            return carry

        jax.lax.fori_loop(0, n_chunks, body, 0)
        y = y_acc_ref[...]

    # w_2 bias, residual add (dropout == identity in eval mode).
    y = y + b2_ref[...].astype(jnp.float32) + x_f32

    # LayerNorm over the channel (last) axis, f32 throughout (biased variance,
    # matching nn.LayerNorm).
    mean = jnp.mean(y, axis=-1, keepdims=True)
    centered = y - mean
    var = jnp.mean(centered * centered, axis=-1, keepdims=True)
    y_hat = centered * jax.lax.rsqrt(var + eps)
    out = (y_hat * g_ref[...].astype(jnp.float32)
           + beta_ref[...].astype(jnp.float32))
    o_ref[...] = out.astype(o_ref.dtype)


def positionwise_feed_forward(x, w1, b1, w2, b2, gamma, beta, *,
                              eps=1e-5, tile_rows=None, hid_chunk=512,
                              use_bf16_matmul=True):
    """x: (B, L, d_in). Conv weights already laid out as matmul matrices:
       w1: (d_in, d_hid), w2: (d_hid, d_in); biases (1, d_hid)/(1, d_in);
       gamma/beta: (1, d_in)."""
    B, L, d_in = x.shape
    d_hid = w1.shape[1]
    rows = B * L

    vmem_cap = _vmem_capacity_bytes()
    vmem_budget = int(vmem_cap * 0.8)   # headroom for compiler scratch/spills

    # Generation-aware row-tile default: bigger tiles on 128 MiB parts
    # (v5e/v6e) amortize the ~0.35us/step pipeline overhead; 256 on v7x.
    if tile_rows is None:
        tile_rows = 512 if vmem_cap >= (100 << 20) else 256

    # Row-tile size: multiple of 8 sublanes, no larger than the row count.
    tile_rows = max(8, min(int(tile_rows), _round_up(rows, 8)))
    tile_rows = _round_up(tile_rows, 8)
    # Keep >= 2 row tiles so dimension_semantics=("parallel",) can shard the
    # row axis across v7x's two TensorCores (cheap elsewhere: one extra step).
    if rows > 8:
        tile_rows = min(tile_rows, _round_up(-(-rows // 2), 8))

    # Hidden-dim chunk (caps the live (tile_rows, hid_chunk) intermediate).
    hid_chunk = min(int(hid_chunk), d_hid)
    if hid_chunk <= 0 or d_hid % hid_chunk != 0:
        hid_chunk = d_hid   # fall back: single chunk

    if use_bf16_matmul:
        w1 = w1.astype(jnp.bfloat16)
        w2 = w2.astype(jnp.bfloat16)

    bpe_x = x.dtype.itemsize
    bpe_w = w1.dtype.itemsize

    def footprint(tr, hc):
        return (2 * tr * d_in * bpe_x                     # x tile (2 buffers)
                + 2 * tr * d_in * bpe_x                   # out tile (2 buffers)
                + (d_in * d_hid + d_hid * d_in) * bpe_w   # W1/W2 single-buffered
                + tr * hc * 4                             # h chunk (f32)
                + tr * d_in * 4                           # y accumulator scratch
                + (2 * d_hid + 3 * d_in) * 4)             # biases / gamma / beta

    # Auto-shrink tile_rows, then hid_chunk, until the footprint fits.
    while footprint(tile_rows, hid_chunk) > vmem_budget and tile_rows > 64:
        tile_rows = max(8, _round_up(tile_rows // 2, 8))
    while (footprint(tile_rows, hid_chunk) > vmem_budget and hid_chunk > 128
           and hid_chunk % 2 == 0 and d_hid % (hid_chunk // 2) == 0):
        hid_chunk //= 2

    n_chunks = d_hid // hid_chunk
    rows_p = _round_up(rows, tile_rows)

    x2d = x.reshape(rows, d_in)
    if rows_p != rows:
        x2d = jnp.pad(x2d, ((0, rows_p - rows), (0, 0)))

    grid = (rows_p // tile_rows,)

    fp = footprint(tile_rows, hid_chunk)
    vmem_limit = int(min(vmem_budget, max(int(fp * 1.25), 16 << 20)))

    cost = pl.CostEstimate(
        flops=4 * rows_p * d_in * d_hid,
        transcendentals=rows_p,               # one rsqrt per row
        bytes_accessed=(2 * rows_p * d_in * bpe_x
                        + 2 * d_in * d_hid * bpe_w
                        + (2 * d_hid + 3 * d_in) * 4),
    )

    out2d = pl.pallas_call(
        functools.partial(_ffn_kernel, eps=eps, hid_chunk=hid_chunk,
                          n_chunks=n_chunks),
        out_shape=jax.ShapeDtypeStruct((rows_p, d_in), x.dtype),
        grid_spec=pltpu.PrefetchScalarGridSpec(
            num_scalar_prefetch=0,
            grid=grid,
            in_specs=[
                pl.BlockSpec((tile_rows, d_in), lambda i: (i, 0)),   # x tile
                _resident_spec((d_in, d_hid)),                       # W1
                _resident_spec((1, d_hid)),                          # b1
                _resident_spec((d_hid, d_in)),                       # W2
                _resident_spec((1, d_in)),                           # b2
                _resident_spec((1, d_in)),                           # gamma
                _resident_spec((1, d_in)),                           # beta
            ],
            out_specs=pl.BlockSpec((tile_rows, d_in), lambda i: (i, 0)),
            scratch_shapes=[pltpu.VMEM((tile_rows, d_in), jnp.float32)],
        ),
        compiler_params=pltpu.CompilerParams(
            dimension_semantics=("parallel",),      # shards across v7x's 2 TCs
            vmem_limit_bytes=vmem_limit),
        cost_estimate=cost,
    )(x2d, w1, b1, w2, b2, gamma, beta)

    if rows_p != rows:
        out2d = out2d[:rows]
    return out2d.reshape(B, L, d_in)


def _reference(x, w1, b1, w2, b2, gamma, beta, eps=1e-5,
               mxu_dtype=jnp.bfloat16):
    """Reference matching the kernel's bf16-operand / f32-accumulate matmuls."""
    xf = x.astype(jnp.float32)
    h = jnp.dot(xf.astype(mxu_dtype), w1.astype(mxu_dtype),
                preferred_element_type=jnp.float32) + b1
    h = jnp.maximum(h, 0.0)
    y = jnp.dot(h.astype(mxu_dtype), w2.astype(mxu_dtype),
                preferred_element_type=jnp.float32) + b2 + xf
    mean = jnp.mean(y, axis=-1, keepdims=True)
    var = jnp.mean((y - mean) ** 2, axis=-1, keepdims=True)
    return ((y - mean) * jax.lax.rsqrt(var + eps)) * gamma + beta


if __name__ == "__main__":
    # Small shapes consistent with the module's forward:
    #   x: (B, L, d_in); Conv1d(d_in, d_hid, 1) / Conv1d(d_hid, d_in, 1).
    # (PyTorch w_1.weight is (d_hid, d_in, 1) -> squeeze + transpose to
    #  (d_in, d_hid) for the matmul layout used here.)
    B, L, d_in = 2, 8, 32
    key = jax.random.PRNGKey(0)

    def make_params(k, d_hid):
        k1, k2, k3, k4 = jax.random.split(k, 4)
        w1 = jax.random.normal(k1, (d_in, d_hid), dtype=jnp.float32) * 0.05
        b1 = jax.random.normal(k2, (1, d_hid), dtype=jnp.float32) * 0.05
        w2 = jax.random.normal(k3, (d_hid, d_in), dtype=jnp.float32) * 0.05
        b2 = jax.random.normal(k4, (1, d_in), dtype=jnp.float32) * 0.05
        gamma = jnp.ones((1, d_in), dtype=jnp.float32)
        beta = jnp.zeros((1, d_in), dtype=jnp.float32)
        return w1, b1, w2, b2, gamma, beta

    kx, kp1, kp2 = jax.random.split(key, 3)
    x = jax.random.normal(kx, (B, L, d_in), dtype=jnp.float32)

    # Test 1: d_hid = 128 (single-chunk fast path).
    p1 = make_params(kp1, 128)
    out = jax.block_until_ready(positionwise_feed_forward(x, *p1))
    assert out.shape == (B, L, d_in)
    ref = _reference(x, *p1)
    assert jnp.allclose(out, ref, atol=5e-3, rtol=5e-3), "mismatch vs reference"
    ref_f32 = _reference(x, *p1, mxu_dtype=jnp.float32)
    assert jnp.allclose(out, ref_f32, atol=5e-2, rtol=5e-2), "drift vs f32 ref"

    # Test 2: d_hid = 256 with hid_chunk = 128 to exercise the chunked
    # fori_loop + scratch-accumulator path.
    p2 = make_params(kp2, 256)
    out2 = jax.block_until_ready(
        positionwise_feed_forward(x, *p2, hid_chunk=128))
    ref2 = _reference(x, *p2)
    assert out2.shape == (B, L, d_in)
    assert jnp.allclose(out2, ref2, atol=5e-3, rtol=5e-3), "chunked path mismatch"

    print("KERNEL_OK")
</pallas_src>

<mosaic_0001>
module attributes {stable_mosaic.version = 11 : i64} {
  func.func @_ffn_kernel(%arg0: i32, %arg1: memref<8x32xf32, #tpu.memory_space<vmem>>, %arg2: memref<32x128xbf16, #tpu.memory_space<vmem>>, %arg3: memref<1x128xf32, #tpu.memory_space<vmem>>, %arg4: memref<128x32xbf16, #tpu.memory_space<vmem>>, %arg5: memref<1x32xf32, #tpu.memory_space<vmem>>, %arg6: memref<1x32xf32, #tpu.memory_space<vmem>>, %arg7: memref<1x32xf32, #tpu.memory_space<vmem>>, %arg8: memref<8x32xf32, #tpu.memory_space<vmem>>, %arg9: memref<8x32xf32, #tpu.memory_space<vmem>>) attributes {dimension_semantics = [#tpu.dimension_semantics<parallel>], iteration_bounds = array<i64: 2>, scalar_prefetch = 0 : i64, scratch_operands = 1 : i64, tpu.core_type = #tpu.core_type<tc>, window_params = [{transform_indices = @transform_0, window_bounds = array<i64: 8, 32>}, {pipeline_mode = #tpu.pipeline_mode<synchronous>, transform_indices = @transform_1, window_bounds = array<i64: 32, 128>}, {pipeline_mode = #tpu.pipeline_mode<synchronous>, transform_indices = @transform_2, window_bounds = array<i64: 1, 128>}, {pipeline_mode = #tpu.pipeline_mode<synchronous>, transform_indices = @transform_3, window_bounds = array<i64: 128, 32>}, {pipeline_mode = #tpu.pipeline_mode<synchronous>, transform_indices = @transform_4, window_bounds = array<i64: 1, 32>}, {pipeline_mode = #tpu.pipeline_mode<synchronous>, transform_indices = @transform_5, window_bounds = array<i64: 1, 32>}, {pipeline_mode = #tpu.pipeline_mode<synchronous>, transform_indices = @transform_6, window_bounds = array<i64: 1, 32>}, {transform_indices = @transform_7, window_bounds = array<i64: 8, 32>}]} {
    %c0 = arith.constant 0 : index
    %c0_0 = arith.constant 0 : index
    %0 = vector.load %arg1[%c0, %c0_0] : memref<8x32xf32, #tpu.memory_space<vmem>>, vector<8x32xf32>
    %1 = arith.truncf %0 : vector<8x32xf32> to vector<8x32xbf16>
    %c0_1 = arith.constant 0 : index
    %c0_2 = arith.constant 0 : index
    %2 = vector.load %arg2[%c0_1, %c0_2] : memref<32x128xbf16, #tpu.memory_space<vmem>>, vector<32x128xbf16>
    %cst = arith.constant dense<0.000000e+00> : vector<8x128xf32>
    %3 = tpu.matmul %1, %2, %cst {dimension_numbers = #tpu.dot_dimension_numbers<[1], [0], [0], [1], [0, 0, 1, 1], [], []>} : vector<8x32xbf16>, vector<32x128xbf16>, vector<8x128xf32> -> vector<8x128xf32>
    %c0_3 = arith.constant 0 : index
    %c0_4 = arith.constant 0 : index
    %4 = vector.load %arg3[%c0_3, %c0_4] : memref<1x128xf32, #tpu.memory_space<vmem>>, vector<1x128xf32>
    %5 = vector.broadcast %4 : vector<1x128xf32> to vector<8x128xf32>
    %6 = arith.addf %3, %5 : vector<8x128xf32>
    %cst_5 = arith.constant 0.000000e+00 : f32
    %7 = vector.broadcast %cst_5 : f32 to vector<8x128xf32>
    %8 = arith.maximumf %6, %7 : vector<8x128xf32>
    %9 = arith.truncf %8 : vector<8x128xf32> to vector<8x128xbf16>
    %c0_6 = arith.constant 0 : index
    %c0_7 = arith.constant 0 : index
    %10 = vector.load %arg4[%c0_6, %c0_7] : memref<128x32xbf16, #tpu.memory_space<vmem>>, vector<128x32xbf16>
    %cst_8 = arith.constant dense<0.000000e+00> : vector<8x32xf32>
    %11 = tpu.matmul %9, %10, %cst_8 {dimension_numbers = #tpu.dot_dimension_numbers<[1], [0], [0], [1], [0, 0, 1, 1], [], []>} : vector<8x128xbf16>, vector<128x32xbf16>, vector<8x32xf32> -> vector<8x32xf32>
    %c0_9 = arith.constant 0 : index
    %c0_10 = arith.constant 0 : index
    %12 = vector.load %arg5[%c0_9, %c0_10] : memref<1x32xf32, #tpu.memory_space<vmem>>, vector<1x32xf32>
    %13 = vector.broadcast %12 : vector<1x32xf32> to vector<8x32xf32>
    %14 = arith.addf %11, %13 : vector<8x32xf32>
    %15 = arith.addf %14, %0 : vector<8x32xf32>
    %cst_11 = arith.constant dense<0.000000e+00> : vector<8xf32>
    %16 = vector.multi_reduction <add>, %15, %cst_11 [1] : vector<8x32xf32> to vector<8xf32>
    %17 = vector.shape_cast %16 : vector<8xf32> to vector<8x1xf32>
    %cst_12 = arith.constant 3.200000e+01 : f32
    %18 = vector.broadcast %cst_12 : f32 to vector<8x1xf32>
    %19 = arith.divf %17, %18 : vector<8x1xf32>
    %20 = vector.broadcast %19 : vector<8x1xf32> to vector<8x32xf32>
    %21 = arith.subf %15, %20 : vector<8x32xf32>
    %22 = arith.mulf %21, %21 : vector<8x32xf32>
    %cst_13 = arith.constant dense<0.000000e+00> : vector<8xf32>
    %23 = vector.multi_reduction <add>, %22, %cst_13 [1] : vector<8x32xf32> to vector<8xf32>
    %24 = vector.shape_cast %23 : vector<8xf32> to vector<8x1xf32>
    %cst_14 = arith.constant 3.200000e+01 : f32
    %25 = vector.broadcast %cst_14 : f32 to vector<8x1xf32>
    %26 = arith.divf %24, %25 : vector<8x1xf32>
    %cst_15 = arith.constant 9.99999974E-6 : f32
    %27 = vector.broadcast %cst_15 : f32 to vector<8x1xf32>
    %28 = arith.addf %26, %27 : vector<8x1xf32>
    %29 = math.rsqrt %28 : vector<8x1xf32>
    %30 = vector.broadcast %29 : vector<8x1xf32> to vector<8x32xf32>
    %31 = arith.mulf %21, %30 : vector<8x32xf32>
    %c0_16 = arith.constant 0 : index
    %c0_17 = arith.constant 0 : index
    %32 = vector.load %arg6[%c0_16, %c0_17] : memref<1x32xf32, #tpu.memory_space<vmem>>, vector<1x32xf32>
    %33 = vector.broadcast %32 : vector<1x32xf32> to vector<8x32xf32>
    %34 = arith.mulf %31, %33 : vector<8x32xf32>
    %c0_18 = arith.constant 0 : index
    %c0_19 = arith.constant 0 : index
    %35 = vector.load %arg7[%c0_18, %c0_19] : memref<1x32xf32, #tpu.memory_space<vmem>>, vector<1x32xf32>
    %36 = vector.broadcast %35 : vector<1x32xf32> to vector<8x32xf32>
    %37 = arith.addf %34, %36 : vector<8x32xf32>
    %c0_20 = arith.constant 0 : index
    %c0_21 = arith.constant 0 : index
    %38 = vector.load %arg8[%c0_20, %c0_21] : memref<8x32xf32, #tpu.memory_space<vmem>>, vector<8x32xf32>
    tpu.vector_store %arg8[%c0_20, %c0_21], %37 {strides = array<i32>} : memref<8x32xf32, #tpu.memory_space<vmem>>, vector<8x32xf32>,
    return
  }
  func.func @transform_0(%arg0: i32) -> (i32, i32) {
    %c0_i32 = arith.constant 0 : i32
    %c0_i32_0 = arith.constant 0 : i32
    return %arg0, %c0_i32 : i32, i32
  }
  func.func @transform_1(%arg0: i32) -> (i32, i32) {
    %c0_i32 = arith.constant 0 : i32
    %c0_i32_0 = arith.constant 0 : i32
    %c0_i32_1 = arith.constant 0 : i32
    return %c0_i32, %c0_i32_0 : i32, i32
  }
  func.func @transform_2(%arg0: i32) -> (i32, i32) {
    %c0_i32 = arith.constant 0 : i32
    %c0_i32_0 = arith.constant 0 : i32
    %c0_i32_1 = arith.constant 0 : i32
    return %c0_i32, %c0_i32_0 : i32, i32
  }
  func.func @transform_3(%arg0: i32) -> (i32, i32) {
    %c0_i32 = arith.constant 0 : i32
    %c0_i32_0 = arith.constant 0 : i32
    %c0_i32_1 = arith.constant 0 : i32
    return %c0_i32, %c0_i32_0 : i32, i32
  }
  func.func @transform_4(%arg0: i32) -> (i32, i32) {
    %c0_i32 = arith.constant 0 : i32
    %c0_i32_0 = arith.constant 0 : i32
    %c0_i32_1 = arith.constant 0 : i32
    return %c0_i32, %c0_i32_0 : i32, i32
  }
  func.func @transform_5(%arg0: i32) -> (i32, i32) {
    %c0_i32 = arith.constant 0 : i32
    %c0_i32_0 = arith.constant 0 : i32
    %c0_i32_1 = arith.constant 0 : i32
    return %c0_i32, %c0_i32_0 : i32, i32
  }
  func.func @transform_6(%arg0: i32) -> (i32, i32) {
    %c0_i32 = arith.constant 0 : i32
    %c0_i32_0 = arith.constant 0 : i32
    %c0_i32_1 = arith.constant 0 : i32
    return %c0_i32, %c0_i32_0 : i32, i32
  }
  func.func @transform_7(%arg0: i32) -> (i32, i32) {
    %c0_i32 = arith.constant 0 : i32
    %c0_i32_0 = arith.constant 0 : i32
    return %arg0, %c0_i32 : i32, i32
  }
}

</mosaic_0001>

<llo_original>
// kernel: tpu_custom_call.1
$region0: #{tpu_custom_call.1}
  #allocation0 [shape = 'u32[]', space=smem, size = 0x4, offset = 0x4, fixed_abs, tag = 'smem constant byte address 0x4 - core index']
  #allocation1 [shape = 'u32[144,128]{1,0:T(1,128)}', space=vmem, size = 0x12000, scoped, tag = 'internal scratch']
  #allocation2 [shape = 'f32[8,32]{1,0:T(8,128)}', space=vmem, size = 0x1000, scoped, tag = 'scratch operand']
  %s0 = inlined_call_operand.vmem [shape: f32[16,32], index: 0, kind: input, shape index: {}]
  %s1 = inlined_call_operand.vmem [shape: bf16[32,128], index: 1, kind: input, shape index: {}]
  %s2 = inlined_call_operand.vmem [shape: f32[1,128], index: 2, kind: input, shape index: {}]
  %s3 = inlined_call_operand.vmem [shape: bf16[128,32], index: 3, kind: input, shape index: {}]
  %s4 = inlined_call_operand.vmem [shape: f32[1,32], index: 4, kind: input, shape index: {}]
  %s5 = inlined_call_operand.vmem [shape: f32[1,32], index: 5, kind: input, shape index: {}]
  %s6 = inlined_call_operand.vmem [shape: f32[1,32], index: 6, kind: input, shape index: {}]
  %s7 = inlined_call_operand.hbm [shape: f32[16,32], index: 7, kind: output, shape index: {}]
  %s8 = sld [smem:[#allocation0]]
  $region61: #{tpu_custom_call.1} parent=0
    _
  %s10 = ssub.s32 1, %s8
  %s11 = scalar_select 0, %s10, %s8
  $region1: #{tpu_custom_call.1} parent=0
    #allocation3 [shape = 'u8[8192]{0}', space=vmem, size = 0x2000, scoped, tag = 'output window, operand 0']
    #allocation4 [shape = 's32[2]{0}', space=sflag, size = 0x8, scoped, tag = 'scoped memory for tpu_custom_call.1']
    %12 = vsyncpa [#allocation4], 0
    %s13 = scalar_lea.sflag [#allocation4], 1
    %14 = vsyncpa %s13, 0
    loop: start=0, step=1, limit=4
    $region2: #{tpu_custom_call.1} parent=1 // loop_pre_header
      _
    $region3: #{tpu_custom_call.1} parent=1 // loop_header
      %s16 = sphi 0, %s20
      %p17 = scmp.ge.s32.totalorder %s16, 4
      %s26 = sphi 0, %s28
      %s29 = sphi 0, %s26
      %s30 = sphi 0, %s29
      %s46 = sphi 0, %s30
      %s50 = sphi 0, %s50
      %s52 = sphi 0, %s50
      %s53 = sphi 0, %s52
      %s67 = sphi 0, %s53
      %s71 = sphi 0, %s71
      %s73 = sphi 0, %s71
      %s74 = sphi 0, %s73
      %s88 = sphi 0, %s74
      %s92 = sphi 0, %s92
      %s94 = sphi 0, %s92
      %s95 = sphi 0, %s94
      %s109 = sphi 0, %s95
      %s113 = sphi 0, %s113
      %s115 = sphi 0, %s113
      %s116 = sphi 0, %s115
      %s130 = sphi 0, %s116
      %s134 = sphi 0, %s134
      %s136 = sphi 0, %s134
      %s137 = sphi 0, %s136
      %s151 = sphi 0, %s137
      %s155 = sphi 0, %s155
      %s157 = sphi 0, %s155
      %s158 = sphi 0, %s157
      %s172 = sphi 0, %s158
      %s178 = sphi 0, %s180
      %s181 = sphi 0, %s178
      %s182 = sphi 0, %s181
      %s198 = sphi 0, %s182
    $region4: #{tpu_custom_call.1} parent=1 // loop_header_branch
      %19 = sbr.rel (%p17) target = $region8
    $region5: #{tpu_custom_call.1} parent=1 // loop_body
      %s21 = ssub.s32 %s16, 1
      %s22 = ssub.s32 %s16, 2
      %s23 = sadd.s32 %s16, 1
      %s24 = ssub.s32 %s16, %s23
      %p25 = scmp.eq.s32.totalorder %s24, 0
      %s27 = sadd.s32 %s26, 1
      %s28 = scalar_select %p25, %s26, %s27
      %p31 = pneg %p25
      %p32 = scmp.eq.s32.totalorder %s16, 1
      %p33 = por %p31, %p32
      %p34 = scmp.ne.s32.totalorder %s26, %s29
      %p35 = scmp.eq.s32.totalorder %s16, 0
      %p36 = por %p34, %p35
      %p37 = scmp.ne.s32.totalorder %s26, %s29
      %p38 = scmp.eq.s32.totalorder %s21, 1
      %p39 = por %p37, %p38
      %p40 = scmp.ne.s32.totalorder %s29, %s30
      %p41 = scmp.eq.s32.totalorder %s21, 0
      %p42 = por %p40, %p41
      %p43 = scmp.ne.s32.totalorder %s29, %s30
      %p44 = scmp.eq.s32.totalorder %s22, 1
      %p45 = por %p43, %p44
      %p47 = scmp.ne.s32.totalorder %s30, %s46
      %p48 = scmp.eq.s32.totalorder %s22, 0
      %p49 = por %p47, %p48
      %s51 = sadd.s32 %s50, 1
      %p54 = scmp.eq.s32.totalorder %s16, 1
      %p55 = scmp.ne.s32.totalorder %s50, %s52
      %p56 = scmp.eq.s32.totalorder %s16, 0
      %p57 = por %p55, %p56
      %p58 = scmp.ne.s32.totalorder %s50, %s52
      %p59 = scmp.eq.s32.totalorder %s21, 1
      %p60 = por %p58, %p59
      %p61 = scmp.ne.s32.totalorder %s52, %s53
      %p62 = scmp.eq.s32.totalorder %s21, 0
      %p63 = por %p61, %p62
      %p64 = scmp.ne.s32.totalorder %s52, %s53
      %p65 = scmp.eq.s32.totalorder %s22, 1
      %p66 = por %p64, %p65
      %p68 = scmp.ne.s32.totalorder %s53, %s67
      %p69 = scmp.eq.s32.totalorder %s22, 0
      %p70 = por %p68, %p69
      %s72 = sadd.s32 %s71, 1
      %p75 = scmp.eq.s32.totalorder %s16, 1
      %p76 = scmp.ne.s32.totalorder %s71, %s73
      %p77 = scmp.eq.s32.totalorder %s16, 0
      %p78 = por %p76, %p77
      %p79 = scmp.ne.s32.totalorder %s71, %s73
      %p80 = scmp.eq.s32.totalorder %s21, 1
      %p81 = por %p79, %p80
      %p82 = scmp.ne.s32.totalorder %s73, %s74
      %p83 = scmp.eq.s32.totalorder %s21, 0
      %p84 = por %p82, %p83
      %p85 = scmp.ne.s32.totalorder %s73, %s74
      %p86 = scmp.eq.s32.totalorder %s22, 1
      %p87 = por %p85, %p86
      %p89 = scmp.ne.s32.totalorder %s74, %s88
      %p90 = scmp.eq.s32.totalorder %s22, 0
      %p91 = por %p89, %p90
      %s93 = sadd.s32 %s92, 1
      %p96 = scmp.eq.s32.totalorder %s16, 1
      %p97 = scmp.ne.s32.totalorder %s92, %s94
      %p98 = scmp.eq.s32.totalorder %s16, 0
      %p99 = por %p97, %p98
      %p100 = scmp.ne.s32.totalorder %s92, %s94
      %p101 = scmp.eq.s32.totalorder %s21, 1
      %p102 = por %p100, %p101
      %p103 = scmp.ne.s32.totalorder %s94, %s95
      %p104 = scmp.eq.s32.totalorder %s21, 0
      %p105 = por %p103, %p104
      %p106 = scmp.ne.s32.totalorder %s94, %s95
      %p107 = scmp.eq.s32.totalorder %s22, 1
      %p108 = por %p106, %p107
      %p110 = scmp.ne.s32.totalorder %s95, %s109
      %p111 = scmp.eq.s32.totalorder %s22, 0
      %p112 = por %p110, %p111
      %s114 = sadd.s32 %s113, 1
      %p117 = scmp.eq.s32.totalorder %s16, 1
      %p118 = scmp.ne.s32.totalorder %s113, %s115
      %p119 = scmp.eq.s32.totalorder %s16, 0
      %p120 = por %p118, %p119
      %p121 = scmp.ne.s32.totalorder %s113, %s115
      %p122 = scmp.eq.s32.totalorder %s21, 1
      %p123 = por %p121, %p122
      %p124 = scmp.ne.s32.totalorder %s115, %s116
      %p125 = scmp.eq.s32.totalorder %s21, 0
      %p126 = por %p124, %p125
      %p127 = scmp.ne.s32.totalorder %s115, %s116
      %p128 = scmp.eq.s32.totalorder %s22, 1
      %p129 = por %p127, %p128
      %p131 = scmp.ne.s32.totalorder %s116, %s130
      %p132 = scmp.eq.s32.totalorder %s22, 0
      %p133 = por %p131, %p132
      %s135 = sadd.s32 %s134, 1
      %p138 = scmp.eq.s32.totalorder %s16, 1
      %p139 = scmp.ne.s32.totalorder %s134, %s136
      %p140 = scmp.eq.s32.totalorder %s16, 0
      %p141 = por %p139, %p140
      %p142 = scmp.ne.s32.totalorder %s134, %s136
      %p143 = scmp.eq.s32.totalorder %s21, 1
      %p144 = por %p142, %p143
      %p145 = scmp.ne.s32.totalorder %s136, %s137
      %p146 = scmp.eq.s32.totalorder %s21, 0
      %p147 = por %p145, %p146
      %p148 = scmp.ne.s32.totalorder %s136, %s137
      %p149 = scmp.eq.s32.totalorder %s22, 1
      %p150 = por %p148, %p149
      %p152 = scmp.ne.s32.totalorder %s137, %s151
      %p153 = scmp.eq.s32.totalorder %s22, 0
      %p154 = por %p152, %p153
      %s156 = sadd.s32 %s155, 1
      %p159 = scmp.eq.s32.totalorder %s16, 1
      %p160 = scmp.ne.s32.totalorder %s155, %s157
      %p161 = scmp.eq.s32.totalorder %s16, 0
      %p162 = por %p160, %p161
      %p163 = scmp.ne.s32.totalorder %s155, %s157
      %p164 = scmp.eq.s32.totalorder %s21, 1
      %p165 = por %p163, %p164
      %p166 = scmp.ne.s32.totalorder %s157, %s158
      %p167 = scmp.eq.s32.totalorder %s21, 0
      %p168 = por %p166, %p167
      %p169 = scmp.ne.s32.totalorder %s157, %s158
      %p170 = scmp.eq.s32.totalorder %s22, 1
      %p171 = por %p169, %p170
      %p173 = scmp.ne.s32.totalorder %s158, %s172
      %p174 = scmp.eq.s32.totalorder %s22, 0
      %p175 = por %p173, %p174
      %s176 = ssub.s32 %s16, %s23
      %p177 = scmp.eq.s32.totalorder %s176, 0
      %s179 = sadd.s32 %s178, 1
      %s180 = scalar_select %p177, %s178, %s179
      %p183 = pneg %p177
      %p184 = scmp.eq.s32.totalorder %s16, 1
      %p185 = por %p183, %p184
      %p186 = scmp.ne.s32.totalorder %s178, %s181
      %p187 = scmp.eq.s32.totalorder %s16, 0
      %p188 = por %p186, %p187
      %p189 = scmp.ne.s32.totalorder %s178, %s181
      %p190 = scmp.eq.s32.totalorder %s21, 1
      %p191 = por %p189, %p190
      %p192 = scmp.ne.s32.totalorder %s181, %s182
      %p193 = scmp.eq.s32.totalorder %s21, 0
      %p194 = por %p192, %p193
      %p195 = scmp.ne.s32.totalorder %s181, %s182
      %p196 = scmp.eq.s32.totalorder %s22, 1
      %p197 = por %p195, %p196
      %p199 = scmp.ne.s32.totalorder %s182, %s198
      %p200 = scmp.eq.s32.totalorder %s22, 0
      %p201 = por %p199, %p200
      %p202 = scmp.le.s32.totalorder 1, %s16
      %p203 = scmp.lt.s32.totalorder %s16, 3
      %p204 = pnand %p202, %p203
      %p205 = pneg %p204
      // Predicated region
      $region9: #{tpu_custom_call.1} parent=5 // pred_check
        _
      $region10: #{tpu_custom_call.1} parent=5 // pred_check_branch
        %207 = sbr.rel (%p204) target = $region12
      $region11: #{tpu_custom_call.1} parent=5 // pred_region
        %s208 = ssub.s32 %s16, 1
        // Predicated region
        $region13: #{tpu_custom_call.1} parent=11 // pred_check
          %p209 = pneg %p63
        $region14: #{tpu_custom_call.1} parent=11 // pred_check_branch
          %211 = sbr.rel (%p209) target = $region16
        $region15: #{tpu_custom_call.1} parent=11 // pred_region
          _
        $region16: #{tpu_custom_call.1} parent=11 // pred_fallthru
          _
        // Predicated region
        $region17: #{tpu_custom_call.1} parent=11 // pred_check
          %p212 = pneg %p84
        $region18: #{tpu_custom_call.1} parent=11 // pred_check_branch
          %214 = sbr.rel (%p212) target = $region20
        $region19: #{tpu_custom_call.1} parent=11 // pred_region
          _
        $region20: #{tpu_custom_call.1} parent=11 // pred_fallthru
          _
        // Predicated region
        $region21: #{tpu_custom_call.1} parent=11 // pred_check
          %p215 = pneg %p105
        $region22: #{tpu_custom_call.1} parent=11 // pred_check_branch
          %217 = sbr.rel (%p215) target = $region24
        $region23: #{tpu_custom_call.1} parent=11 // pred_region
          _
        $region24: #{tpu_custom_call.1} parent=11 // pred_fallthru
          _
        // Predicated region
        $region25: #{tpu_custom_call.1} parent=11 // pred_check
          %p218 = pneg %p126
        $region26: #{tpu_custom_call.1} parent=11 // pred_check_branch
          %220 = sbr.rel (%p218) target = $region28
        $region27: #{tpu_custom_call.1} parent=11 // pred_region
          _
        $region28: #{tpu_custom_call.1} parent=11 // pred_fallthru
          _
        // Predicated region
        $region29: #{tpu_custom_call.1} parent=11 // pred_check
          %p221 = pneg %p147
        $region30: #{tpu_custom_call.1} parent=11 // pred_check_branch
          %223 = sbr.rel (%p221) target = $region32
        $region31: #{tpu_custom_call.1} parent=11 // pred_region
          _
        $region32: #{tpu_custom_call.1} parent=11 // pred_fallthru
          _
        // Predicated region
        $region33: #{tpu_custom_call.1} parent=11 // pred_check
          %p224 = pneg %p168
        $region34: #{tpu_custom_call.1} parent=11 // pred_check_branch
          %226 = sbr.rel (%p224) target = $region36
        $region35: #{tpu_custom_call.1} parent=11 // pred_region
          _
        $region36: #{tpu_custom_call.1} parent=11 // pred_fallthru
          _
      $region12: #{tpu_custom_call.1} parent=5 // pred_fallthru
        _
      %p227 = scmp.lt.s32.totalorder %s16, 2
      // Predicated region
      $region37: #{tpu_custom_call.1} parent=5 // pred_check
        %p228 = pneg %p227
      $region38: #{tpu_custom_call.1} parent=5 // pred_check_branch
        %230 = sbr.rel (%p228) target = $region40
      $region39: #{tpu_custom_call.1} parent=5 // pred_region
        // Predicated region
        $region41: #{tpu_custom_call.1} parent=39 // pred_check
          %p231 = pneg %p36
        $region42: #{tpu_custom_call.1} parent=39 // pred_check_branch
          %233 = sbr.rel (%p231) target = $region44
        $region43: #{tpu_custom_call.1} parent=39 // pred_region
          %p234 = scmp.lt.s32.totalorder %s16, 1
          %s235 = scalar_select %p234, %s16, 1
          %s236 = smul.addr %s235, 8
          %s237 = scalar_lea.vmem %s0, %s236
        $region44: #{tpu_custom_call.1} parent=39 // pred_fallthru
          _
      $region40: #{tpu_custom_call.1} parent=5 // pred_fallthru
        _
      %p238 = scmp.le.s32.totalorder 1, %s16
      %p239 = scmp.lt.s32.totalorder %s16, 3
      %p240 = pnand %p238, %p239
      %p241 = pneg %p240
      // Predicated region
      $region45: #{tpu_custom_call.1} parent=5 // pred_check
        _
      $region46: #{tpu_custom_call.1} parent=5 // pred_check_branch
        %243 = sbr.rel (%p240) target = $region48
      $region47: #{tpu_custom_call.1} parent=5 // pred_region
        %s244 = ssub.s32 %s16, 1
        %p245 = scmp.lt.s32.totalorder %s21, 1
        %s246 = scalar_select %p245, %s21, 1
        %s247 = smul.addr %s246, 8
        %s248 = scalar_lea.vmem %s0, %s247
        %p249 = pneg %p42
        %p250 = pneg %p39
        %p251 = pneg %p63
        %p252 = pneg %p60
        %p253 = pneg %p84
        %p254 = pneg %p81
        %p255 = pneg %p105
        %p256 = pneg %p102
        %p257 = pneg %p126
        %p258 = pneg %p123
        %p259 = pneg %p147
        %p260 = pneg %p144
        %p261 = pneg %p168
        %p262 = pneg %p165
        %p263 = pneg %p194
        %p264 = pneg %p191
        %s265 = sand.u32 %s181, 1
        %s266 = scalar_lea.sflag [#allocation4], %s265
        %s267 = sand.u32 %s181, 1
        %s268 = smul.addr %s267, 8
        %s269 = scalar_lea.vmem [#allocation3], %s268
        %p270 = scmp.lt.s32.totalorder %s21, 1
        %s271 = scalar_select %p270, %s21, 1
        %s272 = smul.addr %s271, 8
        %s273 = scalar_lea.vmem %s0, %s272
        %v275 = vld [vmem:[%s273] sm:$0xff]
        %v276 = vpack.c.bf16 %v275, %v275
        %v277 = vld [vmem:[%s1] sm:$0xf]
        %v278 = vld [vmem:[%s1 + $0x4] sm:$0xf]
        %v279 = vld [vmem:[%s1 + $0x8] sm:$0xf]
        %v280 = vld [vmem:[%s1 + $0xc] sm:$0xf]
        %v281 = vld [vmem:[%s2] sm:$0x1]
        %v283 = vlaneseq
        %v284 = vshrl.u32 %v283, 7
        %v285 = vsub.s32 0, %v284
        %v286 = vrot.slane %v281, %v285
        %v292 = vunpack.c.l.b16 %v277
        %v293 = vunpack.c.l.b16 %v278
        %v294 = vunpack.c.l.b16 %v279
        %v295 = vunpack.c.l.b16 %v280
        %v296 = vpack.c.b16 %v293, %v292
        %v297 = vpack.c.b16 %v295, %v294
        %vm300 = vcmask 261120
        %v302 = vsel %vm300, %v276, 0
        %304 = vmatprep.subr.bf16.mxu0 0
        %305 = vmatpush1.bf16.msra.mxu0 0
        %306 = vmatprep.subr.bf16.mxu0 0
        %307 = vmatpush1.bf16.msra.mxu0 0
        %308 = vmatprep.subr.bf16.mxu0 0
        %309 = vmatpush1.bf16.msra.mxu0 0
        %310 = vmatprep.subr.bf16.mxu0 0
        %311 = vmatpush1.bf16.msra.mxu0 0
        %312 = vmatprep.subr.bf16.mxu0 0
        %313 = vmatpush1.bf16.msra.mxu0 0
        %314 = vmatprep.subr.bf16.mxu0 0
        %315 = vmatpush1.bf16.msra.mxu0 0
        %316 = vmatprep.subr.bf16.mxu0 0
        %317 = vmatpush1.bf16.msra.mxu0 %v297
        %318 = vmatprep.subr.bf16.mxu0 0
        %319 = vmatpush1.bf16.msra.mxu0 %v296
        %320 = vmatprep.subr.bf16.mxu0 0
        %321 = vmatpush2.bf16.msra.mxu0 0
        %322 = vmatprep.subr.bf16.mxu0 0
        %323 = vmatpush2.bf16.msra.mxu0 0
        %324 = vmatprep.subr.bf16.mxu0 0
        %325 = vmatpush2.bf16.msra.mxu0 0
        %326 = vmatprep.subr.bf16.mxu0 0
        %327 = vmatpush2.bf16.msra.mxu0 0
        %328 = vmatprep.subr.bf16.mxu0 0
        %329 = vmatpush2.bf16.msra.mxu0 0
        %330 = vmatprep.subr.bf16.mxu0 0
        %331 = vmatpush2.bf16.msra.mxu0 0
        %332 = vmatprep.subr.bf16.mxu0 0
        %333 = vmatpush2.bf16.msra.mxu0 0
        %334 = vmatprep.subr.bf16.mxu0 0
        %335 = vmatpush2.bf16.msra.mxu0 0
        %336 = vmatprep.mubr.bf16.mxu0 0
        %337 = vmatmul.mubr.bf16.gmra.mxu0 %v302
        %v338 = vpop.f32.mrf.mxu0
        %v339 = vadd.f32 %v286, %v338
        %v340 = vpop.f32.mrf.mxu0
        %v341 = vpop.f32.mrf.mxu0
        %v342 = vpop.f32.mrf.mxu0
        %343 = vdwg.mxu0
        %v344 = vmax.f32 %v339, 0.0
        %v345 = vpack.c.bf16 %v344, %v344
        %v346 = vld [vmem:[%s3] sm:$0xf]
        %v347 = vld [vmem:[%s3 + $0x4] sm:$0xf]
        %v348 = vld [vmem:[%s3 + $0x8] sm:$0xf]
        %v349 = vld [vmem:[%s3 + $0xc] sm:$0xf]
        %v350 = vld [vmem:[%s3 + $0x10] sm:$0xf]
        %v351 = vld [vmem:[%s3 + $0x14] sm:$0xf]
        %v352 = vld [vmem:[%s3 + $0x18] sm:$0xf]
        %v353 = vld [vmem:[%s3 + $0x1c] sm:$0xf]
        %v354 = vld [vmem:[%s3 + $0x20] sm:$0xf]
        %v355 = vld [vmem:[%s3 + $0x24] sm:$0xf]
        %v356 = vld [vmem:[%s3 + $0x28] sm:$0xf]
        %v357 = vld [vmem:[%s3 + $0x2c] sm:$0xf]
        %v358 = vld [vmem:[%s3 + $0x30] sm:$0xf]
        %v359 = vld [vmem:[%s3 + $0x34] sm:$0xf]
        %v360 = vld [vmem:[%s3 + $0x38] sm:$0xf]
        %v361 = vld [vmem:[%s3 + $0x3c] sm:$0xf]
        %v362 = vld [vmem:[%s4] sm:$0x1]
        %v364 = vlaneseq
        %v365 = vshrl.u32 %v364, 7
        %v366 = vsub.s32 0, %v365
        %v367 = vrot.slane %v362, %v366
        %v385 = vunpack.c.l.b16 %v346
        %v386 = vunpack.c.l.b16 %v347
        %v387 = vunpack.c.l.b16 %v348
        %v388 = vunpack.c.l.b16 %v349
        %v389 = vunpack.c.l.b16 %v350
        %v390 = vunpack.c.l.b16 %v351
        %v391 = vunpack.c.l.b16 %v352
        %v392 = vunpack.c.l.b16 %v353
        %v393 = vunpack.c.l.b16 %v354
        %v394 = vunpack.c.l.b16 %v355
        %v395 = vunpack.c.l.b16 %v356
        %v396 = vunpack.c.l.b16 %v357
        %v397 = vunpack.c.l.b16 %v358
        %v398 = vunpack.c.l.b16 %v359
        %v399 = vunpack.c.l.b16 %v360
        %v400 = vunpack.c.l.b16 %v361
        %v401 = vpack.c.b16 %v386, %v385
        %v402 = vpack.c.b16 %v388, %v387
        %v403 = vpack.c.b16 %v390, %v389
        %v404 = vpack.c.b16 %v392, %v391
        %v405 = vpack.c.b16 %v394, %v393
        %v406 = vpack.c.b16 %v396, %v395
        %v407 = vpack.c.b16 %v398, %v397
        %v408 = vpack.c.b16 %v400, %v399
        %417 = vmatprep.subr.bf16.mxu0 0
        %418 = vmatpush1.bf16.msra.mxu0 %v408
        %419 = vmatprep.subr.bf16.mxu0 0
        %420 = vmatpush1.bf16.msra.mxu0 %v407
        %421 = vmatprep.subr.bf16.mxu0 0
        %422 = vmatpush1.bf16.msra.mxu0 %v406
        %423 = vmatprep.subr.bf16.mxu0 0
        %424 = vmatpush1.bf16.msra.mxu0 %v405
        %425 = vmatprep.subr.bf16.mxu0 0
        %426 = vmatpush1.bf16.msra.mxu0 %v404
        %427 = vmatprep.subr.bf16.mxu0 0
        %428 = vmatpush1.bf16.msra.mxu0 %v403
        %429 = vmatprep.subr.bf16.mxu0 0
        %430 = vmatpush1.bf16.msra.mxu0 %v402
        %431 = vmatprep.subr.bf16.mxu0 0
        %432 = vmatpush1.bf16.msra.mxu0 %v401
        %433 = vmatprep.subr.bf16.mxu0 0
        %434 = vmatpush2.bf16.msra.mxu0 0
        %435 = vmatprep.subr.bf16.mxu0 0
        %436 = vmatpush2.bf16.msra.mxu0 0
        %437 = vmatprep.subr.bf16.mxu0 0
        %438 = vmatpush2.bf16.msra.mxu0 0
        %439 = vmatprep.subr.bf16.mxu0 0
        %440 = vmatpush2.bf16.msra.mxu0 0
        %441 = vmatprep.subr.bf16.mxu0 0
        %442 = vmatpush2.bf16.msra.mxu0 0
        %443 = vmatprep.subr.bf16.mxu0 0
        %444 = vmatpush2.bf16.msra.mxu0 0
        %445 = vmatprep.subr.bf16.mxu0 0
        %446 = vmatpush2.bf16.msra.mxu0 0
        %447 = vmatprep.subr.bf16.mxu0 0
        %448 = vmatpush2.bf16.msra.mxu0 0
        %449 = vmatprep.mubr.bf16.mxu0 0
        %450 = vmatmul.mubr.bf16.gmra.mxu0 %v345
        %v451 = vpop.f32.mrf.mxu0
        %v452 = vadd.f32 %v367, %v451
        %v453 = vpop.f32.mrf.mxu0
        %v454 = vpop.f32.mrf.mxu0
        %v455 = vpop.f32.mrf.mxu0
        %456 = vdwg.mxu0
        %v457 = vadd.f32 %v452, %v275
        %v458 = vsel %vm300, %v457, 0.0
        %459 = vadd.xlane.f32.xlu0 %v458
        %v460 = vpop.xlane.xlu0 %459
        %v461 = vrcp.pop 32.0
        %v462 = vmul.f32 %v460, %v461
        %v463 = vsub.f32 %v457, %v462
        %v464 = vmul.f32 %v463, %v463
        %v465 = vsel %vm300, %v464, 0.0
        %466 = vadd.xlane.f32.xlu0 %v465
        %v467 = vpop.xlane.xlu0 %466
        %v468 = vmul.f32 %v467, %v461
        %v469 = vadd.f32 %v468, 1e-05
        %v470 = vrsqrt.pop %v469
        %v471 = vmul.f32 %v463, %v470
        %v472 = vld [vmem:[%s5] sm:$0x1]
        %v474 = vlaneseq
        %v475 = vshrl.u32 %v474, 7
        %v476 = vsub.s32 0, %v475
        %v477 = vrot.slane %v472, %v476
        %v479 = vmul.f32 %v471, %v477
        %v480 = vld [vmem:[%s6] sm:$0x1]
        %v482 = vlaneseq
        %v483 = vshrl.u32 %v482, 7
        %v484 = vsub.s32 0, %v483
        %v485 = vrot.slane %v480, %v484
        %v487 = vadd.f32 %v479, %v485
        %488 = vst.msk [vmem:[%s269] sm:$0xff] %vm300, %v487
        %s489 = sand.u32 %s181, 1
        %s490 = scalar_lea.sflag [#allocation4], %s489
        %s491 = sand.u32 %s181, 1
        %s492 = smul.addr %s491, 8
        %s493 = scalar_lea.vmem [#allocation3], %s492
        // Predicated region
        $region49: #{tpu_custom_call.1} parent=47 // pred_check
          %p494 = pneg %p191
        $region50: #{tpu_custom_call.1} parent=47 // pred_check_branch
          %496 = sbr.rel (%p494) target = $region52
        $region51: #{tpu_custom_call.1} parent=47 // pred_region
          %s498 = ssub.s32 128, 128
          %499 = vsyncadd %s490, %s498
          %s500 = smul.addr %s21, 128
          %s501 = scalar_lea.hbm %s7, %s500
          %s503 = sshll.u32 %s493, 4
          %s504 = int_to_ptr.vmem [resolvable:$true] %s503
          %506 = dma.vmem_to_hbm [thread:$0]  %s504, 128, %s501, %s490
        $region52: #{tpu_custom_call.1} parent=47 // pred_fallthru
          _
      $region48: #{tpu_custom_call.1} parent=5 // pred_fallthru
        _
      %p507 = scmp.le.s32.totalorder 2, %s16
      // Predicated region
      $region53: #{tpu_custom_call.1} parent=5 // pred_check
        %p508 = pneg %p507
      $region54: #{tpu_custom_call.1} parent=5 // pred_check_branch
        %510 = sbr.rel (%p508) target = $region56
      $region55: #{tpu_custom_call.1} parent=5 // pred_region
        %s511 = ssub.s32 %s16, 2
        // Predicated region
        $region57: #{tpu_custom_call.1} parent=55 // pred_check
          %p512 = pneg %p197
        $region58: #{tpu_custom_call.1} parent=55 // pred_check_branch
          %514 = sbr.rel (%p512) target = $region60
        $region59: #{tpu_custom_call.1} parent=55 // pred_region
          %s515 = sand.u32 %s182, 1
          %s516 = scalar_lea.sflag [#allocation4], %s515
          %s517 = sand.u32 %s182, 1
          %s518 = smul.addr %s517, 8
          %s519 = scalar_lea.vmem [#allocation3], %s518
          %520 = dma.done %s516, 128
        $region60: #{tpu_custom_call.1} parent=55 // pred_fallthru
          _
      $region56: #{tpu_custom_call.1} parent=5 // pred_fallthru
        _
    $region6: #{tpu_custom_call.1} parent=1 // loop_footer
      %s20 = sadd.s32 1, %s16
    $region7: #{tpu_custom_call.1} parent=1 // loop_footer_branch
      %15 = sbr.rel target = $region3
    $region8: #{tpu_custom_call.1} parent=1 // loop_exit
      _
    %521 = vsyncpa [#allocation4], 1
    %s522 = scalar_lea.sflag [#allocation4], 1
    %523 = vsyncpa %s522, 1

</llo_original>
